<compile_context>
chip_gen: v7x
topology: tpu7x:2x2x1
jax: 0.10.0
libtpu: 0.0.40
codegen_flags: <defaults>
</compile_context>

<pallas_src>
import functools

import jax
import jax.numpy as jnp
from jax.experimental import pallas as pl
from jax.experimental.pallas import tpu as pltpu


# Trace-time dispatch heuristics (shapes are static).
_SMALL_TOTAL_BYTES = 1 << 20   # < 1 MiB total: launch/DMA-setup overhead dominates.
_MIN_ROW_BYTES = 512           # per-row chunk < 512 B: strided DMA is descriptor-bound.
_MAX_ROW_SPLITS = 8            # concurrent row-chunk DMAs per input per grid step.
_MAX_GRID_CORES = 2            # shard rows across TCs (helps v7x; harmless on v5e/v6e).


def _concat_dma_kernel(x_hbm, y_hbm, o_hbm, sem, *, rows_per_step, k_splits, k1, k2):
    """Issue 2*k_splits concurrent HBM->HBM DMAs for this grid step's rows.

    x_hbm: (N, k1), y_hbm: (N, k2), o_hbm: (N, k1+k2) -- raw HBM refs.
    All DMAs are started before any wait, the column slices are disjoint,
    and every DMA is waited before the kernel exits, so there is no race.
    """
    row0 = pl.program_id(0) * rows_per_step
    chunk = rows_per_step // k_splits  # static; k_splits divides rows_per_step

    copies = []
    for i in range(k_splits):
        r = row0 + i * chunk
        cx = pltpu.make_async_copy(
            x_hbm.at[pl.ds(r, chunk), :],
            o_hbm.at[pl.ds(r, chunk), pl.ds(0, k1)],
            sem.at[0, i])
        cy = pltpu.make_async_copy(
            y_hbm.at[pl.ds(r, chunk), :],
            o_hbm.at[pl.ds(r, chunk), pl.ds(k1, k2)],
            sem.at[1, i])
        cx.start()
        cy.start()
        copies.append(cx)
        copies.append(cy)
    for cp in copies:
        cp.wait()


def _largest_divisor_leq(n, cap):
    for d in range(min(cap, n), 0, -1):
        if n % d == 0:
            return d
    return 1


def concat_layer(x, y, *, force_kernel=False):
    """torch.cat([x, y], dim=1) for NCHW tensors via a Pallas TPU DMA kernel."""
    assert x.ndim == 4 and y.ndim == 4
    n, c1, h, w = x.shape
    n2, c2, h2, w2 = y.shape
    assert (n, h, w) == (n2, h2, w2), "non-concat dims must match"
    assert x.dtype == y.dtype

    k1 = c1 * h * w
    k2 = c2 * h * w
    itemsize = jnp.dtype(x.dtype).itemsize
    total_bytes = n * (k1 + k2) * itemsize

    # TODO(synk): the biggest absolute win is at graph level -- fuse the concat
    # into the producer/consumer (offset writes / two in_specs) so the 2x HBM
    # round trip never happens; that cannot be expressed inside this kernel.

    small = total_bytes < _SMALL_TOTAL_BYTES
    tiny_rows = (k1 * itemsize < _MIN_ROW_BYTES) or (k2 * itemsize < _MIN_ROW_BYTES)
    if (small or tiny_rows) and not force_kernel:
        # Fixed kernel-launch + DMA-descriptor cost would dwarf the copy, or the
        # strided DMA would be descriptor-rate-bound; let XLA handle it.
        return jnp.concatenate([x, y], axis=1)

    # Free, contiguous views: channel axis folded with the spatial dims so the
    # concat becomes a split along the lane-dense last dim.
    x2 = x.reshape(n, k1)
    y2 = y.reshape(n, k2)

    grid_g = _largest_divisor_leq(n, _MAX_GRID_CORES)      # row groups (TC sharding)
    rows_per_step = n // grid_g
    k_splits = _largest_divisor_leq(rows_per_step, _MAX_ROW_SPLITS)

    kernel = functools.partial(
        _concat_dma_kernel,
        rows_per_step=rows_per_step, k_splits=k_splits, k1=k1, k2=k2)

    out2 = pl.pallas_call(
        kernel,
        out_shape=jax.ShapeDtypeStruct((n, k1 + k2), x.dtype),
        grid=(grid_g,),
        in_specs=[
            pl.BlockSpec(memory_space=pl.ANY),
            pl.BlockSpec(memory_space=pl.ANY),
        ],
        out_specs=pl.BlockSpec(memory_space=pl.ANY),
        scratch_shapes=[pltpu.SemaphoreType.DMA((2, k_splits))],
        compiler_params=pltpu.CompilerParams(
            dimension_semantics=("parallel",)),
        cost_estimate=pl.CostEstimate(
            flops=0,
            transcendentals=0,
            bytes_accessed=2 * total_bytes),  # read + write of every byte
    )(x2, y2)

    return out2.reshape(n, c1 + c2, h, w)


if __name__ == "__main__":
    key = jax.random.PRNGKey(0)
    kx, ky = jax.random.split(key)

    # Small NCHW inputs per the module spec: batch=2, channels 4 and 6, 16x16.
    x = jax.random.normal(kx, (2, 4, 16, 16), dtype=jnp.float32)
    y = jax.random.normal(ky, (2, 6, 16, 16), dtype=jnp.float32)
    ref = jnp.concatenate([x, y], axis=1)

    # 1) Default dispatch: small input routes to the jnp.concatenate fast path.
    out = concat_layer(x, y)
    jax.block_until_ready(out)
    assert out.shape == (2, 10, 16, 16)
    assert out.dtype == x.dtype
    assert jnp.array_equal(out, ref)

    # 2) Exercise the Pallas DMA kernel on the same small shapes.
    out_k = concat_layer(x, y, force_kernel=True)
    jax.block_until_ready(out_k)
    assert jnp.array_equal(out_k, ref)

    # 3) A >1 MiB input takes the DMA path by default (grid=2, k_splits=4).
    xb = jnp.arange(8 * 16 * 32 * 32, dtype=jnp.float32).reshape(8, 16, 32, 32)
    yb = -jnp.arange(8 * 24 * 32 * 32, dtype=jnp.float32).reshape(8, 24, 32, 32)
    outb = concat_layer(xb, yb)
    jax.block_until_ready(outb)
    refb = jnp.concatenate([xb, yb], axis=1)
    assert outb.shape == (8, 40, 32, 32)
    assert jnp.array_equal(outb, refb)

    print("KERNEL_OK")
</pallas_src>

<mosaic_0001>
module attributes {stable_mosaic.version = 11 : i64} {
  func.func @_concat_dma_kernel(%arg0: i32, %arg1: memref<2x1024xf32, #tpu.memory_space<any>>, %arg2: memref<2x1536xf32, #tpu.memory_space<any>>, %arg3: memref<2x2560xf32, #tpu.memory_space<any>>, %arg4: memref<2x1x!tpu.dma_semaphore, #tpu.memory_space<semaphore_mem>>) attributes {dimension_semantics = [#tpu.dimension_semantics<parallel>], iteration_bounds = array<i64: 2>, scalar_prefetch = 0 : i64, scratch_operands = 1 : i64, tpu.core_type = #tpu.core_type<tc>, window_params = [{}, {}, {}]} {
    %c1_i32 = arith.constant 1 : i32
    %0 = arith.muli %arg0, %c1_i32 : i32
    %c0_i32 = arith.constant 0 : i32
    %1 = arith.addi %0, %c0_i32 : i32
    %c0_i32_0 = arith.constant 0 : i32
    %c0_i32_1 = arith.constant 0 : i32
    %c0_i32_2 = arith.constant 0 : i32
    %2 = tpu.memref_slice %arg1[%1, %c0_i32_2] : memref<2x1024xf32, #tpu.memory_space<any>> -> memref<1x1024xf32, #tpu.memory_space<any>>
    %c0_i32_3 = arith.constant 0 : i32
    %3 = tpu.memref_slice %arg3[%1, %c0_i32_3] : memref<2x2560xf32, #tpu.memory_space<any>> -> memref<1x1024xf32, #tpu.memory_space<any>>
    %4 = tpu.memref_slice %arg4[%c0_i32_0, %c0_i32_1] : memref<2x1x!tpu.dma_semaphore, #tpu.memory_space<semaphore_mem>> -> memref<1x1x!tpu.dma_semaphore, #tpu.memory_space<semaphore_mem>>
    %5 = tpu.memref_squeeze %4 : memref<1x1x!tpu.dma_semaphore, #tpu.memory_space<semaphore_mem>> -> memref<!tpu.dma_semaphore, #tpu.memory_space<semaphore_mem>>
    tpu.enqueue_dma source(%2 : memref<1x1024xf32, #tpu.memory_space<any>>) target(%3 : memref<1x1024xf32, #tpu.memory_space<any>>) target_semaphore(%5 : memref<!tpu.dma_semaphore, #tpu.memory_space<semaphore_mem>>)
    %c1_i32_4 = arith.constant 1 : i32
    %c0_i32_5 = arith.constant 0 : i32
    %c0_i32_6 = arith.constant 0 : i32
    %6 = tpu.memref_slice %arg2[%1, %c0_i32_6] : memref<2x1536xf32, #tpu.memory_space<any>> -> memref<1x1536xf32, #tpu.memory_space<any>>
    %c1024_i32 = arith.constant 1024 : i32
    %7 = tpu.memref_slice %arg3[%1, %c1024_i32] : memref<2x2560xf32, #tpu.memory_space<any>> -> memref<1x1536xf32, #tpu.memory_space<any>>
    %8 = tpu.memref_slice %arg4[%c1_i32_4, %c0_i32_5] : memref<2x1x!tpu.dma_semaphore, #tpu.memory_space<semaphore_mem>> -> memref<1x1x!tpu.dma_semaphore, #tpu.memory_space<semaphore_mem>>
    %9 = tpu.memref_squeeze %8 : memref<1x1x!tpu.dma_semaphore, #tpu.memory_space<semaphore_mem>> -> memref<!tpu.dma_semaphore, #tpu.memory_space<semaphore_mem>>
    tpu.enqueue_dma source(%6 : memref<1x1536xf32, #tpu.memory_space<any>>) target(%7 : memref<1x1536xf32, #tpu.memory_space<any>>) target_semaphore(%9 : memref<!tpu.dma_semaphore, #tpu.memory_space<semaphore_mem>>)
    %c0_i32_7 = arith.constant 0 : i32
    %c0_i32_8 = arith.constant 0 : i32
    %c0_i32_9 = arith.constant 0 : i32
    %10 = tpu.memref_slice %arg1[%1, %c0_i32_9] : memref<2x1024xf32, #tpu.memory_space<any>> -> memref<1x1024xf32, #tpu.memory_space<any>>
    %c0_i32_10 = arith.constant 0 : i32
    %11 = tpu.memref_slice %arg3[%1, %c0_i32_10] : memref<2x2560xf32, #tpu.memory_space<any>> -> memref<1x1024xf32, #tpu.memory_space<any>>
    %12 = tpu.memref_slice %arg4[%c0_i32_7, %c0_i32_8] : memref<2x1x!tpu.dma_semaphore, #tpu.memory_space<semaphore_mem>> -> memref<1x1x!tpu.dma_semaphore, #tpu.memory_space<semaphore_mem>>
    %13 = tpu.memref_squeeze %12 : memref<1x1x!tpu.dma_semaphore, #tpu.memory_space<semaphore_mem>> -> memref<!tpu.dma_semaphore, #tpu.memory_space<semaphore_mem>>
    tpu.wait_dma2 semaphore(%13 : memref<!tpu.dma_semaphore, #tpu.memory_space<semaphore_mem>>) src(%10 : memref<1x1024xf32, #tpu.memory_space<any>>) dst(%11 : memref<1x1024xf32, #tpu.memory_space<any>>)
    %c1_i32_11 = arith.constant 1 : i32
    %c0_i32_12 = arith.constant 0 : i32
    %c0_i32_13 = arith.constant 0 : i32
    %14 = tpu.memref_slice %arg2[%1, %c0_i32_13] : memref<2x1536xf32, #tpu.memory_space<any>> -> memref<1x1536xf32, #tpu.memory_space<any>>
    %c1024_i32_14 = arith.constant 1024 : i32
    %15 = tpu.memref_slice %arg3[%1, %c1024_i32_14] : memref<2x2560xf32, #tpu.memory_space<any>> -> memref<1x1536xf32, #tpu.memory_space<any>>
    %16 = tpu.memref_slice %arg4[%c1_i32_11, %c0_i32_12] : memref<2x1x!tpu.dma_semaphore, #tpu.memory_space<semaphore_mem>> -> memref<1x1x!tpu.dma_semaphore, #tpu.memory_space<semaphore_mem>>
    %17 = tpu.memref_squeeze %16 : memref<1x1x!tpu.dma_semaphore, #tpu.memory_space<semaphore_mem>> -> memref<!tpu.dma_semaphore, #tpu.memory_space<semaphore_mem>>
    tpu.wait_dma2 semaphore(%17 : memref<!tpu.dma_semaphore, #tpu.memory_space<semaphore_mem>>) src(%14 : memref<1x1536xf32, #tpu.memory_space<any>>) dst(%15 : memref<1x1536xf32, #tpu.memory_space<any>>)
    return
  }
}

</mosaic_0001>

<llo_original>
// kernel: tpu_custom_call.1
$region0: #{tpu_custom_call.1}
  #allocation0 [shape = 'u32[]', space=smem, size = 0x4, offset = 0x4, fixed_abs, tag = 'smem constant byte address 0x4 - core index']
  #allocation1 [shape = 'u32[144,128]{1,0:T(1,128)}', space=vmem, size = 0x12000, scoped, tag = 'internal scratch']
  #allocation2 [shape = 's32[2]{0}', space=sflag, size = 0x8, scoped, tag = 'scratch operand']
  #allocation3 [shape = 's32[]', space=sflag, size = 0x4, offset = 0, fixed_abs, tag = 'sflag constant byte address 0x0 - dummy sync flag']
  #allocation5 [shape = 's32[]', space=sflag, size = 0x4, offset = 0, fixed_abs, tag = 'sflag constant byte address 0x0 - dummy sync flag']
  %s0 = inlined_call_operand.hbm [shape: f32[2,1024], index: 0, kind: input, shape index: {}]
  %s1 = inlined_call_operand.hbm [shape: f32[2,1536], index: 1, kind: input, shape index: {}]
  %s2 = inlined_call_operand.hbm [shape: f32[2,2560], index: 2, kind: output, shape index: {}]
  %s3 = sld [smem:[#allocation0]]
  $region9: #{tpu_custom_call.1} parent=0
    _
  %s5 = ssub.s32 1, %s3
  %s6 = scalar_select 0, %s5, %s3
  loop: start=0, step=1, limit=2
  $region2: #{tpu_custom_call.1} parent=0 // loop_pre_header
    _
  $region3: #{tpu_custom_call.1} parent=0 // loop_header
    %s8 = sphi 0, %s12
    %p9 = scmp.ge.s32.totalorder %s8, 2
  $region4: #{tpu_custom_call.1} parent=0 // loop_header_branch
    %11 = sbr.rel (%p9) target = $region8
  $region5: #{tpu_custom_call.1} parent=0 // loop_body
    #allocation4 [shape = 'u32[3]{0}', space=smem, size = 0xc, scoped, tag = 'DMA stride descriptor']
    #allocation6 [shape = 'u32[3]{0}', space=smem, size = 0xc, scoped, tag = 'DMA stride descriptor']
    %s13 = sadd.s32 %s8, 1
    %s14 = sshrl.u32 %s8, 1
    %s15 = sand.u32 %s8, 1
    %s16 = smul.u32 %s14, 16
    %s17 = sadd.s32 %s15, %s16
    %s18 = smul.addr %s17, 16
    %s19 = scalar_lea.hbm %s0, %s18
    %s20 = smul.u32 %s14, 40
    %s21 = sadd.s32 %s15, %s20
    %s22 = smul.addr %s21, 16
    %s23 = scalar_lea.hbm %s2, %s22
    %s25 = sshll.u32 1, 14
    %s26 = sxor.u32 4294967295, %s25
    %s29 = sshll.u32 3, 24
    %s30 = sxor.u32 4294967295, %s29
    %s31 = sand.u32 0, %s30
    %s33 = sor.u32 %s31, 0
    %36 = sst [smem:[#allocation4]] 32
    %s37 = scalar_lea.smem [#allocation4], 1
    %38 = sst [smem:[%s37]] 32
    %s39 = scalar_lea.smem [#allocation4], 2
    %40 = sst [smem:[%s39]] 1
    %42 = dma.general %s19, 128, %s23, [#allocation2], [#allocation3], [#allocation4], %s33, 0
    %s43 = smul.u32 %s14, 24
    %s44 = sadd.s32 %s15, %s43
    %s45 = smul.addr %s44, 16
    %s46 = scalar_lea.hbm %s1, %s45
    %s47 = sadd.s32 16, %s21
    %s48 = smul.addr %s47, 16
    %s49 = scalar_lea.hbm %s2, %s48
    %s50 = scalar_lea.sflag [#allocation2], 1
    %s52 = sshll.u32 1, 14
    %s53 = sxor.u32 4294967295, %s52
    %s56 = sshll.u32 3, 24
    %s57 = sxor.u32 4294967295, %s56
    %s58 = sand.u32 0, %s57
    %s60 = sor.u32 %s58, 0
    %63 = sst [smem:[#allocation6]] 32
    %s64 = scalar_lea.smem [#allocation6], 1
    %65 = sst [smem:[%s64]] 32
    %s66 = scalar_lea.smem [#allocation6], 2
    %67 = sst [smem:[%s66]] 1
    %69 = dma.general %s46, 192, %s49, %s50, [#allocation5], [#allocation6], %s60, 0
    %s70 = smul.u32 1, 8
    %s71 = sshll.u32 %s70, 4
    %72 = dma.done [#allocation2], %s71
    %s73 = smul.u32 1, 12
    %s74 = sshll.u32 %s73, 4
    %75 = dma.done %s50, %s74
  $region6: #{tpu_custom_call.1} parent=0 // loop_footer
    %s12 = sadd.s32 1, %s8
  $region7: #{tpu_custom_call.1} parent=0 // loop_footer_branch
    %7 = sbr.rel target = $region3
  $region8: #{tpu_custom_call.1} parent=0 // loop_exit
    _
  %76 = vsyncmov [#allocation2]
  %s77 = vpop.sfrf %76
  %p78 = scmp.eq.s32.totalorder %s77, 0
  %p79 = pneg %p78
  %81 = shalt.err (%p79)
  %s82 = scalar_lea.sflag [#allocation2], 1
  %83 = vsyncmov %s82
  %s84 = vpop.sfrf %83
  %p85 = scmp.eq.s32.totalorder %s84, 0
  %p86 = pneg %p85
  %88 = shalt.err (%p86)

</llo_original>
